<compile_context>
chip_gen: v7x
topology: tpu7x:2x2x1
jax: 0.10.0
libtpu: 0.0.40
codegen_flags: <defaults>
</compile_context>

<pallas_src>
import functools

import numpy as np
import jax
import jax.numpy as jnp
from jax.experimental import pallas as pl
from jax.experimental.pallas import tpu as pltpu


def _torus_conv_kernel(x_ref, w_ref, b_ref, o_ref, *, H, W, KH, KW, Cp, Co):
    # x_ref: (1, Cp, H*W)  one image, channels zero-padded to Cp, lane-dense flat image
    # w_ref: (Co, KH*KW*Cp) BN-scale-folded weights, rows [o], cols [(kh,kw),c]
    # b_ref: (Co, 1)        fused BN(+conv-bias) bias
    # o_ref: (1, Co, H*W)   lane-dense output (reshaped back to NCHW by the wrapper)
    HW = H * W
    eh, ew = KH // 2, KW // 2
    x2d = x_ref[0]                                            # (Cp, HW)

    def flat_roll(a, shift):
        s = shift % HW
        if s == 0:
            return a
        return jnp.roll(a, s, axis=1)

    lane = jax.lax.broadcasted_iota(jnp.int32, (Cp, HW), 1)
    wcol = lane % W                                           # column index within each row

    def col_shift(dw):
        # out[c, h*W + w] = x[c, h*W + (w + dw) % W]   (wrap within each row)
        if dw == 0:
            return x2d
        if dw > 0:
            return jnp.where(wcol >= W - dw,
                             flat_roll(x2d, W - dw),
                             flat_roll(x2d, -dw))
        d = -dw
        return jnp.where(wcol < d,
                         flat_roll(x2d, -(W - d)),
                         flat_roll(x2d, d))

    col_shifted = [col_shift(kw - ew) for kw in range(KW)]

    # Row wrap is a flat roll by multiples of W: ((h+dh)%H)*W + w == (h*W + w + dh*W) % (H*W).
    taps = []
    for kh in range(KH):
        dh = kh - eh
        for kw in range(KW):
            taps.append(flat_roll(col_shifted[kw], -dh * W))  # each (Cp, HW)
    patches = jnp.concatenate(taps, axis=0)                   # (KH*KW*Cp, HW), sublane-aligned

    acc = jnp.dot(w_ref[...], patches,
                  preferred_element_type=jnp.float32)         # (Co, HW), single MXU pass
    o_ref[0] = (acc + b_ref[...]).astype(o_ref.dtype)


def torus_conv2d(x_nchw, weight_oihw, conv_bias, gamma, beta, run_mean, run_var, eps=1e-5):
    """Forward pass of TorusConv2d (eval-mode BN). x_nchw: (N, Ci, H, W) -> (N, Co, H, W)."""
    N, Ci, H, W = x_nchw.shape
    Co, Ci_w, KH, KW = weight_oihw.shape
    assert Ci_w == Ci
    assert KH % 2 == 1 and KW % 2 == 1, "TorusConv2d Pallas kernel requires odd kernel sizes"
    HW = H * W
    Cp = ((Ci + 7) // 8) * 8                                   # pad channels to sublane multiple

    # --- fold eval-mode BN + conv bias into weights / bias ---
    scale = gamma / jnp.sqrt(run_var + eps)                    # (Co,)
    bias = (conv_bias - run_mean) * scale + beta               # (Co,)

    w4 = jnp.transpose(weight_oihw, (0, 2, 3, 1))              # (Co, KH, KW, Ci)
    if Cp != Ci:
        w4 = jnp.pad(w4, ((0, 0), (0, 0), (0, 0), (0, Cp - Ci)))
    w_mat = (w4.reshape(Co, KH * KW * Cp) * scale[:, None]).astype(jnp.float32)
    bias2 = bias.reshape(Co, 1).astype(jnp.float32)

    # --- free reshape of NCHW to a lane-dense flat image; zero-pad channels ---
    x_flat = x_nchw.reshape(N, Ci, HW).astype(jnp.float32)
    if Cp != Ci:
        x_flat = jnp.concatenate(
            [x_flat, jnp.zeros((N, Cp - Ci, HW), jnp.float32)], axis=1)

    kernel = functools.partial(_torus_conv_kernel,
                               H=H, W=W, KH=KH, KW=KW, Cp=Cp, Co=Co)

    out_flat = pl.pallas_call(
        kernel,
        out_shape=jax.ShapeDtypeStruct((N, Co, HW), jnp.float32),
        grid_spec=pltpu.PrefetchScalarGridSpec(
            num_scalar_prefetch=0,
            grid=(N,),
            in_specs=[
                pl.BlockSpec((1, Cp, HW), lambda n: (n, 0, 0)),
                pl.BlockSpec((Co, KH * KW * Cp), lambda n: (0, 0)),
                pl.BlockSpec((Co, 1), lambda n: (0, 0)),
            ],
            out_specs=pl.BlockSpec((1, Co, HW), lambda n: (n, 0, 0)),
        ),
        compiler_params=pltpu.CompilerParams(dimension_semantics=("parallel",)),
    )(x_flat, w_mat, bias2)

    return out_flat.reshape(N, Co, H, W)                       # free reshape back to NCHW


def _reference(x_nchw, weight_oihw, conv_bias, gamma, beta, run_mean, run_var, eps=1e-5):
    """Pure-JAX reference mirroring the PyTorch forward (eval-mode BN)."""
    KH, KW = weight_oihw.shape[2], weight_oihw.shape[3]
    eh, ew = KH // 2, KW // 2
    h = jnp.concatenate([x_nchw[:, :, :, -ew:], x_nchw, x_nchw[:, :, :, :ew]], axis=3)
    h = jnp.concatenate([h[:, :, -eh:], h, h[:, :, :eh]], axis=2)
    h = jax.lax.conv_general_dilated(
        h, weight_oihw, window_strides=(1, 1), padding="VALID",
        dimension_numbers=("NCHW", "OIHW", "NCHW"))
    h = h + conv_bias[None, :, None, None]
    scale = gamma / jnp.sqrt(run_var + eps)
    return (h - run_mean[None, :, None, None]) * scale[None, :, None, None] \
        + beta[None, :, None, None]


if __name__ == "__main__":
    # Module config: TorusConv2d(input_dim=4, output_dim=8, kernel_size=(3, 3), bn=True)
    N, Ci, H, W = 2, 4, 16, 16
    Co, KH, KW = 8, 3, 3

    key = jax.random.PRNGKey(0)
    k_x, k_w, k_b, k_g, k_be, k_m, k_v = jax.random.split(key, 7)

    x = jax.random.normal(k_x, (N, Ci, H, W), jnp.float32)
    weight = jax.random.normal(k_w, (Co, Ci, KH, KW), jnp.float32) * 0.1
    conv_bias = jax.random.normal(k_b, (Co,), jnp.float32) * 0.1
    gamma = 1.0 + 0.1 * jax.random.normal(k_g, (Co,), jnp.float32)
    beta = 0.1 * jax.random.normal(k_be, (Co,), jnp.float32)
    run_mean = 0.1 * jax.random.normal(k_m, (Co,), jnp.float32)
    run_var = jnp.abs(1.0 + 0.1 * jax.random.normal(k_v, (Co,), jnp.float32))

    out = torus_conv2d(x, weight, conv_bias, gamma, beta, run_mean, run_var)
    out = jax.block_until_ready(out)

    ref = jax.block_until_ready(
        _reference(x, weight, conv_bias, gamma, beta, run_mean, run_var))
    np.testing.assert_allclose(np.asarray(out), np.asarray(ref), rtol=1e-4, atol=1e-4)

    print("KERNEL_OK")
</pallas_src>

<mosaic_0001>
module attributes {stable_mosaic.version = 11 : i64} {
  func.func @_torus_conv_kernel(%arg0: i32, %arg1: memref<1x8x256xf32, #tpu.memory_space<vmem>>, %arg2: memref<8x72xf32, #tpu.memory_space<vmem>>, %arg3: memref<8x1xf32, #tpu.memory_space<vmem>>, %arg4: memref<1x8x256xf32, #tpu.memory_space<vmem>>) attributes {dimension_semantics = [#tpu.dimension_semantics<parallel>], iteration_bounds = array<i64: 2>, scalar_prefetch = 0 : i64, scratch_operands = 0 : i64, tpu.core_type = #tpu.core_type<tc>, window_params = [{transform_indices = @transform_0, window_bounds = array<i64: 1, 8, 256>}, {pipeline_mode = #tpu.pipeline_mode<synchronous>, transform_indices = @transform_1, window_bounds = array<i64: 8, 72>}, {pipeline_mode = #tpu.pipeline_mode<synchronous>, transform_indices = @transform_2, window_bounds = array<i64: 8, 1>}, {transform_indices = @transform_3, window_bounds = array<i64: 1, 8, 256>}]} {
    %c0 = arith.constant 0 : index
    %c0_0 = arith.constant 0 : index
    %c0_1 = arith.constant 0 : index
    %0 = vector.load %arg1[%c0, %c0_0, %c0_1] : memref<1x8x256xf32, #tpu.memory_space<vmem>>, vector<1x8x256xf32>
    %1 = vector.shape_cast %0 : vector<1x8x256xf32> to vector<8x256xf32>
    %2 = tpu.iota {dimensions = array<i32: 1>} : vector<8x256xi32>
    %c16_i32 = arith.constant 16 : i32
    %c0_i32 = arith.constant 0 : i32
    %3 = arith.cmpi eq, %c16_i32, %c0_i32 : i32
    %c1_i32 = arith.constant 1 : i32
    %4 = arith.select %3, %c1_i32, %c16_i32 : i32
    %5 = vector.broadcast %4 : i32 to vector<8x256xi32>
    %6 = arith.remsi %2, %5 : vector<8x256xi32>
    %c0_i32_2 = arith.constant 0 : i32
    %7 = vector.broadcast %c0_i32_2 : i32 to vector<8x256xi32>
    %8 = arith.cmpi ne, %6, %7 : vector<8x256xi32>
    %c0_i32_3 = arith.constant 0 : i32
    %9 = vector.broadcast %c0_i32_3 : i32 to vector<8x256xi32>
    %10 = arith.cmpi slt, %6, %9 : vector<8x256xi32>
    %c0_i32_4 = arith.constant 0 : i32
    %11 = arith.cmpi slt, %4, %c0_i32_4 : i32
    %12 = vector.broadcast %11 : i1 to vector<8x256xi1>
    %13 = vector.broadcast %12 : vector<8x256xi1> to vector<8x256xi1>
    %14 = arith.xori %10, %13 : vector<8x256xi1>
    %15 = arith.andi %14, %8 : vector<8x256xi1>
    %16 = vector.broadcast %4 : i32 to vector<8x256xi32>
    %17 = arith.addi %6, %16 : vector<8x256xi32>
    %18 = arith.select %15, %17, %6 : vector<8x256xi1>, vector<8x256xi32>
    %c1_i32_5 = arith.constant 1 : i32
    %19 = vector.broadcast %c1_i32_5 : i32 to vector<8x256xi32>
    %20 = arith.cmpi slt, %18, %19 : vector<8x256xi32>
    %21 = vector.extract_strided_slice %1 {offsets = [0, 15], sizes = [8, 241], strides = [1, 1]} : vector<8x256xf32> to vector<8x241xf32>
    %22 = vector.extract_strided_slice %1 {offsets = [0, 0], sizes = [8, 15], strides = [1, 1]} : vector<8x256xf32> to vector<8x15xf32>
    %23 = tpu.concatenate %21, %22 in 1 : vector<8x241xf32>, vector<8x15xf32> -> vector<8x256xf32>
    %24 = vector.extract_strided_slice %1 {offsets = [0, 255], sizes = [8, 1], strides = [1, 1]} : vector<8x256xf32> to vector<8x1xf32>
    %25 = vector.extract_strided_slice %1 {offsets = [0, 0], sizes = [8, 255], strides = [1, 1]} : vector<8x256xf32> to vector<8x255xf32>
    %26 = tpu.concatenate %24, %25 in 1 : vector<8x1xf32>, vector<8x255xf32> -> vector<8x256xf32>
    %27 = arith.select %20, %23, %26 : vector<8x256xi1>, vector<8x256xf32>
    %c15_i32 = arith.constant 15 : i32
    %28 = vector.broadcast %c15_i32 : i32 to vector<8x256xi32>
    %29 = arith.cmpi sge, %18, %28 : vector<8x256xi32>
    %30 = vector.extract_strided_slice %1 {offsets = [0, 241], sizes = [8, 15], strides = [1, 1]} : vector<8x256xf32> to vector<8x15xf32>
    %31 = vector.extract_strided_slice %1 {offsets = [0, 0], sizes = [8, 241], strides = [1, 1]} : vector<8x256xf32> to vector<8x241xf32>
    %32 = tpu.concatenate %30, %31 in 1 : vector<8x15xf32>, vector<8x241xf32> -> vector<8x256xf32>
    %33 = vector.extract_strided_slice %1 {offsets = [0, 1], sizes = [8, 255], strides = [1, 1]} : vector<8x256xf32> to vector<8x255xf32>
    %34 = vector.extract_strided_slice %1 {offsets = [0, 0], sizes = [8, 1], strides = [1, 1]} : vector<8x256xf32> to vector<8x1xf32>
    %35 = tpu.concatenate %33, %34 in 1 : vector<8x255xf32>, vector<8x1xf32> -> vector<8x256xf32>
    %36 = arith.select %29, %32, %35 : vector<8x256xi1>, vector<8x256xf32>
    %37 = vector.extract_strided_slice %27 {offsets = [0, 240], sizes = [8, 16], strides = [1, 1]} : vector<8x256xf32> to vector<8x16xf32>
    %38 = vector.extract_strided_slice %27 {offsets = [0, 0], sizes = [8, 240], strides = [1, 1]} : vector<8x256xf32> to vector<8x240xf32>
    %39 = tpu.concatenate %37, %38 in 1 : vector<8x16xf32>, vector<8x240xf32> -> vector<8x256xf32>
    %40 = vector.extract_strided_slice %1 {offsets = [0, 240], sizes = [8, 16], strides = [1, 1]} : vector<8x256xf32> to vector<8x16xf32>
    %41 = vector.extract_strided_slice %1 {offsets = [0, 0], sizes = [8, 240], strides = [1, 1]} : vector<8x256xf32> to vector<8x240xf32>
    %42 = tpu.concatenate %40, %41 in 1 : vector<8x16xf32>, vector<8x240xf32> -> vector<8x256xf32>
    %43 = vector.extract_strided_slice %36 {offsets = [0, 240], sizes = [8, 16], strides = [1, 1]} : vector<8x256xf32> to vector<8x16xf32>
    %44 = vector.extract_strided_slice %36 {offsets = [0, 0], sizes = [8, 240], strides = [1, 1]} : vector<8x256xf32> to vector<8x240xf32>
    %45 = tpu.concatenate %43, %44 in 1 : vector<8x16xf32>, vector<8x240xf32> -> vector<8x256xf32>
    %46 = vector.extract_strided_slice %27 {offsets = [0, 16], sizes = [8, 240], strides = [1, 1]} : vector<8x256xf32> to vector<8x240xf32>
    %47 = vector.extract_strided_slice %27 {offsets = [0, 0], sizes = [8, 16], strides = [1, 1]} : vector<8x256xf32> to vector<8x16xf32>
    %48 = tpu.concatenate %46, %47 in 1 : vector<8x240xf32>, vector<8x16xf32> -> vector<8x256xf32>
    %49 = vector.extract_strided_slice %1 {offsets = [0, 16], sizes = [8, 240], strides = [1, 1]} : vector<8x256xf32> to vector<8x240xf32>
    %50 = vector.extract_strided_slice %1 {offsets = [0, 0], sizes = [8, 16], strides = [1, 1]} : vector<8x256xf32> to vector<8x16xf32>
    %51 = tpu.concatenate %49, %50 in 1 : vector<8x240xf32>, vector<8x16xf32> -> vector<8x256xf32>
    %52 = vector.extract_strided_slice %36 {offsets = [0, 16], sizes = [8, 240], strides = [1, 1]} : vector<8x256xf32> to vector<8x240xf32>
    %53 = vector.extract_strided_slice %36 {offsets = [0, 0], sizes = [8, 16], strides = [1, 1]} : vector<8x256xf32> to vector<8x16xf32>
    %54 = tpu.concatenate %52, %53 in 1 : vector<8x240xf32>, vector<8x16xf32> -> vector<8x256xf32>
    %55 = tpu.concatenate %39, %42, %45, %27, %1, %36, %48, %51, %54 in 0 : vector<8x256xf32>, vector<8x256xf32>, vector<8x256xf32>, vector<8x256xf32>, vector<8x256xf32>, vector<8x256xf32>, vector<8x256xf32>, vector<8x256xf32>, vector<8x256xf32> -> vector<72x256xf32>
    %c0_6 = arith.constant 0 : index
    %c0_7 = arith.constant 0 : index
    %56 = vector.load %arg2[%c0_6, %c0_7] : memref<8x72xf32, #tpu.memory_space<vmem>>, vector<8x72xf32>
    %cst = arith.constant dense<0.000000e+00> : vector<8x256xf32>
    %57 = tpu.matmul %56, %55, %cst {dimension_numbers = #tpu.dot_dimension_numbers<[1], [0], [0], [1], [0, 0, 1, 1], [], []>} : vector<8x72xf32>, vector<72x256xf32>, vector<8x256xf32> -> vector<8x256xf32>
    %c0_8 = arith.constant 0 : index
    %c0_9 = arith.constant 0 : index
    %58 = vector.load %arg3[%c0_8, %c0_9] : memref<8x1xf32, #tpu.memory_space<vmem>>, vector<8x1xf32>
    %59 = vector.broadcast %58 : vector<8x1xf32> to vector<8x256xf32>
    %60 = arith.addf %57, %59 : vector<8x256xf32>
    %c0_10 = arith.constant 0 : index
    %c0_11 = arith.constant 0 : index
    %c0_12 = arith.constant 0 : index
    %61 = vector.load %arg4[%c0_10, %c0_11, %c0_12] : memref<1x8x256xf32, #tpu.memory_space<vmem>>, vector<1x8x256xf32>
    %62 = vector.shape_cast %61 : vector<1x8x256xf32> to vector<8x256xf32>
    %63 = vector.shape_cast %60 : vector<8x256xf32> to vector<1x8x256xf32>
    tpu.vector_store %arg4[%c0_10, %c0_11, %c0_12], %63 {strides = array<i32>} : memref<1x8x256xf32, #tpu.memory_space<vmem>>, vector<1x8x256xf32>,
    return
  }
  func.func @transform_0(%arg0: i32) -> (i32, i32, i32) {
    %c0_i32 = arith.constant 0 : i32
    %c0_i32_0 = arith.constant 0 : i32
    %c0_i32_1 = arith.constant 0 : i32
    return %arg0, %c0_i32, %c0_i32_0 : i32, i32, i32
  }
  func.func @transform_1(%arg0: i32) -> (i32, i32) {
    %c0_i32 = arith.constant 0 : i32
    %c0_i32_0 = arith.constant 0 : i32
    %c0_i32_1 = arith.constant 0 : i32
    return %c0_i32, %c0_i32_0 : i32, i32
  }
  func.func @transform_2(%arg0: i32) -> (i32, i32) {
    %c0_i32 = arith.constant 0 : i32
    %c0_i32_0 = arith.constant 0 : i32
    %c0_i32_1 = arith.constant 0 : i32
    return %c0_i32, %c0_i32_0 : i32, i32
  }
  func.func @transform_3(%arg0: i32) -> (i32, i32, i32) {
    %c0_i32 = arith.constant 0 : i32
    %c0_i32_0 = arith.constant 0 : i32
    %c0_i32_1 = arith.constant 0 : i32
    return %arg0, %c0_i32, %c0_i32_0 : i32, i32, i32
  }
}

</mosaic_0001>

<llo_original>
// kernel: tpu_custom_call.1
$region0: #{tpu_custom_call.1}
  #allocation0 [shape = 'u32[]', space=smem, size = 0x4, offset = 0x4, fixed_abs, tag = 'smem constant byte address 0x4 - core index']
  #allocation1 [shape = 'u32[144,128]{1,0:T(1,128)}', space=vmem, size = 0x12000, scoped, tag = 'internal scratch']
  %s0 = inlined_call_operand.hbm [shape: f32[2,8,256], index: 0, kind: input, shape index: {}]
  %s1 = inlined_call_operand.vmem [shape: f32[8,72], index: 1, kind: input, shape index: {}]
  %s2 = inlined_call_operand.vmem [shape: f32[8,1], index: 2, kind: input, shape index: {}]
  %s3 = inlined_call_operand.hbm [shape: f32[2,8,256], index: 3, kind: output, shape index: {}]
  %s4 = sld [smem:[#allocation0]]
  $region49: #{tpu_custom_call.1} parent=0
    _
  %s6 = ssub.s32 1, %s4
  %s7 = scalar_select 0, %s6, %s4
  $region1: #{tpu_custom_call.1} parent=0
    #allocation2 [shape = 'u8[16384]{0}', space=vmem, size = 0x4000, scoped, tag = 'input window, operand 0']
    #allocation3 [shape = 's32[2]{0}', space=sflag, size = 0x8, scoped, tag = 'scoped memory for tpu_custom_call.1']
    #allocation4 [shape = 's32[2]{0}', space=sflag, size = 0x8, scoped, tag = 'scoped memory for tpu_custom_call.1']
    #allocation5 [shape = 'u8[16384]{0}', space=vmem, size = 0x4000, scoped, tag = 'output window, operand 0']
    %8 = vsyncpa [#allocation3], 0
    %s9 = scalar_lea.sflag [#allocation3], 1
    %10 = vsyncpa %s9, 0
    %11 = vsyncpa [#allocation4], 0
    %s12 = scalar_lea.sflag [#allocation4], 1
    %13 = vsyncpa %s12, 0
    loop: start=0, step=1, limit=4
    $region2: #{tpu_custom_call.1} parent=1 // loop_pre_header
      _
    $region3: #{tpu_custom_call.1} parent=1 // loop_header
      %s15 = sphi 0, %s19
      %p16 = scmp.ge.s32.totalorder %s15, 4
      %s25 = sphi 0, %s27
      %s28 = sphi 0, %s25
      %s29 = sphi 0, %s28
      %s45 = sphi 0, %s29
      %s49 = sphi 0, %s49
      %s51 = sphi 0, %s49
      %s52 = sphi 0, %s51
      %s66 = sphi 0, %s52
      %s70 = sphi 0, %s70
      %s72 = sphi 0, %s70
      %s73 = sphi 0, %s72
      %s87 = sphi 0, %s73
      %s93 = sphi 0, %s95
      %s96 = sphi 0, %s93
      %s97 = sphi 0, %s96
      %s113 = sphi 0, %s97
    $region4: #{tpu_custom_call.1} parent=1 // loop_header_branch
      %18 = sbr.rel (%p16) target = $region8
    $region5: #{tpu_custom_call.1} parent=1 // loop_body
      %s20 = ssub.s32 %s15, 1
      %s21 = ssub.s32 %s15, 2
      %s22 = sadd.s32 %s15, 1
      %s23 = ssub.s32 %s15, %s22
      %p24 = scmp.eq.s32.totalorder %s23, 0
      %s26 = sadd.s32 %s25, 1
      %s27 = scalar_select %p24, %s25, %s26
      %p30 = pneg %p24
      %p31 = scmp.eq.s32.totalorder %s15, 1
      %p32 = por %p30, %p31
      %p33 = scmp.ne.s32.totalorder %s25, %s28
      %p34 = scmp.eq.s32.totalorder %s15, 0
      %p35 = por %p33, %p34
      %p36 = scmp.ne.s32.totalorder %s25, %s28
      %p37 = scmp.eq.s32.totalorder %s20, 1
      %p38 = por %p36, %p37
      %p39 = scmp.ne.s32.totalorder %s28, %s29
      %p40 = scmp.eq.s32.totalorder %s20, 0
      %p41 = por %p39, %p40
      %p42 = scmp.ne.s32.totalorder %s28, %s29
      %p43 = scmp.eq.s32.totalorder %s21, 1
      %p44 = por %p42, %p43
      %p46 = scmp.ne.s32.totalorder %s29, %s45
      %p47 = scmp.eq.s32.totalorder %s21, 0
      %p48 = por %p46, %p47
      %s50 = sadd.s32 %s49, 1
      %p53 = scmp.eq.s32.totalorder %s15, 1
      %p54 = scmp.ne.s32.totalorder %s49, %s51
      %p55 = scmp.eq.s32.totalorder %s15, 0
      %p56 = por %p54, %p55
      %p57 = scmp.ne.s32.totalorder %s49, %s51
      %p58 = scmp.eq.s32.totalorder %s20, 1
      %p59 = por %p57, %p58
      %p60 = scmp.ne.s32.totalorder %s51, %s52
      %p61 = scmp.eq.s32.totalorder %s20, 0
      %p62 = por %p60, %p61
      %p63 = scmp.ne.s32.totalorder %s51, %s52
      %p64 = scmp.eq.s32.totalorder %s21, 1
      %p65 = por %p63, %p64
      %p67 = scmp.ne.s32.totalorder %s52, %s66
      %p68 = scmp.eq.s32.totalorder %s21, 0
      %p69 = por %p67, %p68
      %s71 = sadd.s32 %s70, 1
      %p74 = scmp.eq.s32.totalorder %s15, 1
      %p75 = scmp.ne.s32.totalorder %s70, %s72
      %p76 = scmp.eq.s32.totalorder %s15, 0
      %p77 = por %p75, %p76
      %p78 = scmp.ne.s32.totalorder %s70, %s72
      %p79 = scmp.eq.s32.totalorder %s20, 1
      %p80 = por %p78, %p79
      %p81 = scmp.ne.s32.totalorder %s72, %s73
      %p82 = scmp.eq.s32.totalorder %s20, 0
      %p83 = por %p81, %p82
      %p84 = scmp.ne.s32.totalorder %s72, %s73
      %p85 = scmp.eq.s32.totalorder %s21, 1
      %p86 = por %p84, %p85
      %p88 = scmp.ne.s32.totalorder %s73, %s87
      %p89 = scmp.eq.s32.totalorder %s21, 0
      %p90 = por %p88, %p89
      %s91 = ssub.s32 %s15, %s22
      %p92 = scmp.eq.s32.totalorder %s91, 0
      %s94 = sadd.s32 %s93, 1
      %s95 = scalar_select %p92, %s93, %s94
      %p98 = pneg %p92
      %p99 = scmp.eq.s32.totalorder %s15, 1
      %p100 = por %p98, %p99
      %p101 = scmp.ne.s32.totalorder %s93, %s96
      %p102 = scmp.eq.s32.totalorder %s15, 0
      %p103 = por %p101, %p102
      %p104 = scmp.ne.s32.totalorder %s93, %s96
      %p105 = scmp.eq.s32.totalorder %s20, 1
      %p106 = por %p104, %p105
      %p107 = scmp.ne.s32.totalorder %s96, %s97
      %p108 = scmp.eq.s32.totalorder %s20, 0
      %p109 = por %p107, %p108
      %p110 = scmp.ne.s32.totalorder %s96, %s97
      %p111 = scmp.eq.s32.totalorder %s21, 1
      %p112 = por %p110, %p111
      %p114 = scmp.ne.s32.totalorder %s97, %s113
      %p115 = scmp.eq.s32.totalorder %s21, 0
      %p116 = por %p114, %p115
      %p117 = scmp.le.s32.totalorder 1, %s15
      %p118 = scmp.lt.s32.totalorder %s15, 3
      %p119 = pnand %p117, %p118
      %p120 = pneg %p119
      // Predicated region
      $region9: #{tpu_custom_call.1} parent=5 // pred_check
        _
      $region10: #{tpu_custom_call.1} parent=5 // pred_check_branch
        %122 = sbr.rel (%p119) target = $region12
      $region11: #{tpu_custom_call.1} parent=5 // pred_region
        %s123 = ssub.s32 %s15, 1
        // Predicated region
        $region13: #{tpu_custom_call.1} parent=11 // pred_check
          %p124 = pneg %p62
        $region14: #{tpu_custom_call.1} parent=11 // pred_check_branch
          %126 = sbr.rel (%p124) target = $region16
        $region15: #{tpu_custom_call.1} parent=11 // pred_region
          _
        $region16: #{tpu_custom_call.1} parent=11 // pred_fallthru
          _
        // Predicated region
        $region17: #{tpu_custom_call.1} parent=11 // pred_check
          %p127 = pneg %p83
        $region18: #{tpu_custom_call.1} parent=11 // pred_check_branch
          %129 = sbr.rel (%p127) target = $region20
        $region19: #{tpu_custom_call.1} parent=11 // pred_region
          _
        $region20: #{tpu_custom_call.1} parent=11 // pred_fallthru
          _
      $region12: #{tpu_custom_call.1} parent=5 // pred_fallthru
        _
      %p130 = scmp.lt.s32.totalorder %s15, 2
      // Predicated region
      $region21: #{tpu_custom_call.1} parent=5 // pred_check
        %p131 = pneg %p130
      $region22: #{tpu_custom_call.1} parent=5 // pred_check_branch
        %133 = sbr.rel (%p131) target = $region24
      $region23: #{tpu_custom_call.1} parent=5 // pred_region
        // Predicated region
        $region25: #{tpu_custom_call.1} parent=23 // pred_check
          %p134 = pneg %p35
        $region26: #{tpu_custom_call.1} parent=23 // pred_check_branch
          %136 = sbr.rel (%p134) target = $region28
        $region27: #{tpu_custom_call.1} parent=23 // pred_region
          %s137 = sand.u32 %s25, 1
          %s138 = scalar_lea.sflag [#allocation3], %s137
          %s139 = sand.u32 %s25, 1
          %s140 = smul.addr %s139, 16
          %s141 = scalar_lea.vmem [#allocation2], %s140
          %s143 = ssub.s32 256, 256
          %144 = vsyncadd %s138, %s143
          %s145 = smul.addr %s15, 2
          %s146 = smul.addr %s145, 128
          %s147 = scalar_lea.hbm %s0, %s146
          %s149 = sshll.u32 %s141, 4
          %s150 = int_to_ptr.vmem [resolvable:$true] %s149
          %152 = dma.hbm_to_vmem [thread:$0]  %s147, 256, %s150, %s138
        $region28: #{tpu_custom_call.1} parent=23 // pred_fallthru
          _
      $region24: #{tpu_custom_call.1} parent=5 // pred_fallthru
        _
      %p153 = scmp.le.s32.totalorder 1, %s15
      %p154 = scmp.lt.s32.totalorder %s15, 3
      %p155 = pnand %p153, %p154
      %p156 = pneg %p155
      // Predicated region
      $region29: #{tpu_custom_call.1} parent=5 // pred_check
        _
      $region30: #{tpu_custom_call.1} parent=5 // pred_check_branch
        %158 = sbr.rel (%p155) target = $region32
      $region31: #{tpu_custom_call.1} parent=5 // pred_region
        %s159 = ssub.s32 %s15, 1
        %s160 = sand.u32 %s28, 1
        %s161 = scalar_lea.sflag [#allocation3], %s160
        %s162 = sand.u32 %s28, 1
        %s163 = smul.addr %s162, 16
        %s164 = scalar_lea.vmem [#allocation2], %s163
        // Predicated region
        $region33: #{tpu_custom_call.1} parent=31 // pred_check
          %p165 = pneg %p41
        $region34: #{tpu_custom_call.1} parent=31 // pred_check_branch
          %167 = sbr.rel (%p165) target = $region36
        $region35: #{tpu_custom_call.1} parent=31 // pred_region
          %168 = dma.done %s161, 256
        $region36: #{tpu_custom_call.1} parent=31 // pred_fallthru
          _
        %s169 = sand.u32 %s28, 1
        %s170 = scalar_lea.sflag [#allocation3], %s169
        %s171 = sand.u32 %s28, 1
        %s172 = smul.addr %s171, 16
        %s173 = scalar_lea.vmem [#allocation2], %s172
        %p174 = pneg %p41
        %p175 = pneg %p38
        %p176 = pneg %p62
        %p177 = pneg %p59
        %p178 = pneg %p83
        %p179 = pneg %p80
        %p180 = pneg %p109
        %p181 = pneg %p106
        %s182 = sand.u32 %s96, 1
        %s183 = scalar_lea.sflag [#allocation4], %s182
        %s184 = sand.u32 %s96, 1
        %s185 = smul.addr %s184, 16
        %s186 = scalar_lea.vmem [#allocation5], %s185
        %v187 = vld [vmem:[%s164] sm:$0xff]
        %v188 = vld [vmem:[%s164 + $0x8] sm:$0xff]
        %v189 = vlaneseq
        %v190 = vand.u32 %v189, 127
        %v191 = vadd.s32 %v190, 128
        %vm192 = vcmp.lt.s32.totalorder %v190, 0
        %v193 = vsub.s32 0, %v190
        %v194 = vsel %vm192, %v193, %v190
        %v195 = vshrl.u32 %v194, 4
        %v196 = vand.u32 %v194, 15
        %v197 = vsub.s32 0, %v196
        %v198 = vsel %vm192, %v197, %v196
        %vm199 = vcmp.lt.s32.totalorder %v191, 0
        %v200 = vsub.s32 0, %v191
        %v201 = vsel %vm199, %v200, %v191
        %v202 = vshrl.u32 %v201, 4
        %v203 = vand.u32 %v201, 15
        %v204 = vsub.s32 0, %v203
        %v205 = vsel %vm199, %v204, %v203
        %vm206 = vcmp.ne.s32.totalorder %v198, 0
        %vm207 = vcmp.ne.s32.totalorder %v205, 0
        %vm208 = vcmp.lt.s32.totalorder %v198, 0
        %vm209 = vcmp.lt.s32.totalorder %v205, 0
        %vm210 = vmand %vm208, %vm206
        %vm211 = vmand %vm209, %vm207
        %v212 = vadd.s32 %v198, 16
        %v213 = vadd.s32 %v205, 16
        %v214 = vsel %vm210, %v212, %v198
        %v215 = vsel %vm211, %v213, %v205
        %vm216 = vcmp.lt.s32.totalorder %v214, 1
        %vm217 = vcmp.lt.s32.totalorder %v215, 1
        %220 = vrot.lane.b32.xlu0 %v187, 113
        %v221 = vpop.permute.xlu0 %220
        %222 = vrot.lane.b32.xlu0 %v188, 113
        %v223 = vpop.permute.xlu0 %222
        %vm224 = vcmask 924672
        %v225 = vsel %vm224, %v221, %v223
        %v229 = vsel %vm224, %v223, %v221
        %230 = vrot.lane.b32.xlu0 %v188, 1
        %v231 = vpop.permute.xlu0 %230
        %233 = vrot.lane.b32.xlu0 %v187, 1
        %v234 = vpop.permute.xlu0 %233
        %vm235 = vcmask 7168
        %v236 = vsel %vm235, %v234, %v231
        %v239 = vsel %vm235, %v231, %v234
        %v240 = vsel %vm216, %v225, %v239
        %v241 = vsel %vm217, %v229, %v236
        %vm242 = vcmp.ge.s32.totalorder %v214, 15
        %vm243 = vcmp.ge.s32.totalorder %v215, 15
        %244 = vrot.lane.b32.xlu0 %v188, 15
        %v245 = vpop.permute.xlu0 %244
        %247 = vrot.lane.b32.xlu0 %v187, 15
        %v248 = vpop.permute.xlu0 %247
        %vm249 = vcmask 121856
        %v250 = vsel %vm249, %v248, %v245
        %v253 = vsel %vm249, %v245, %v248
        %254 = vrot.lane.b32.xlu0 %v187, 127
        %v255 = vpop.permute.xlu0 %254
        %256 = vrot.lane.b32.xlu0 %v188, 127
        %v257 = vpop.permute.xlu0 %256
        %vm258 = vcmask 1039360
        %v259 = vsel %vm258, %v255, %v257
        %v263 = vsel %vm258, %v257, %v255
        %v264 = vsel %vm242, %v253, %v259
        %v265 = vsel %vm243, %v250, %v263
        %267 = vrot.lane.b32.xlu0 %v241, 16
        %v268 = vpop.permute.xlu0 %267
        %271 = vrot.lane.b32.xlu0 %v240, 16
        %v272 = vpop.permute.xlu0 %271
        %vm273 = vcmask 130048
        %v274 = vsel %vm273, %v272, %v268
        %v277 = vsel %vm273, %v268, %v272
        %278 = vrot.lane.b32.xlu0 %v188, 16
        %v279 = vpop.permute.xlu0 %278
        %281 = vrot.lane.b32.xlu0 %v187, 16
        %v282 = vpop.permute.xlu0 %281
        %v283 = vsel %vm273, %v282, %v279
        %v286 = vsel %vm273, %v279, %v282
        %288 = vrot.lane.b32.xlu0 %v265, 16
        %v289 = vpop.permute.xlu0 %288
        %292 = vrot.lane.b32.xlu0 %v264, 16
        %v293 = vpop.permute.xlu0 %292
        %v294 = vsel %vm273, %v293, %v289
        %v297 = vsel %vm273, %v289, %v293
        %298 = vrot.lane.b32.xlu0 %v240, 112
        %v299 = vpop.permute.xlu0 %298
        %300 = vrot.lane.b32.xlu0 %v241, 112
        %v301 = vpop.permute.xlu0 %300
        %vm302 = vcmask 916480
        %v303 = vsel %vm302, %v299, %v301
        %v307 = vsel %vm302, %v301, %v299
        %308 = vrot.lane.b32.xlu0 %v187, 112
        %v309 = vpop.permute.xlu0 %308
        %310 = vrot.lane.b32.xlu0 %v188, 112
        %v311 = vpop.permute.xlu0 %310
        %v312 = vsel %vm302, %v309, %v311
        %v316 = vsel %vm302, %v311, %v309
        %317 = vrot.lane.b32.xlu0 %v264, 112
        %v318 = vpop.permute.xlu0 %317
        %319 = vrot.lane.b32.xlu0 %v265, 112
        %v320 = vpop.permute.xlu0 %319
        %v321 = vsel %vm302, %v318, %v320
        %v325 = vsel %vm302, %v320, %v318
        %v326 = vld [vmem:[%s1] sm:$0xff]
        %v327 = vld [vmem:[%s2] sm:$0xff]
        %329 = vset.pattern.permute.xlu0 0
        %330 = vperm.xlu0 %329, %v327
        %v331 = vpop.permute.xlu0 %330
        %vm333 = vcmask 588800
        %v335 = vsel %vm333, %v326, 0
        %337 = vmatprep.subr.mxu0 %v274
        %338 = vmatpush1.msra.mxu0 %v277
        %339 = vmatprep.subr.mxu0 %v283
        %340 = vmatpush1.msra.mxu0 %v286
        %341 = vmatprep.subr.mxu0 %v294
        %342 = vmatpush1.msra.mxu0 %v297
        %343 = vmatprep.subr.mxu0 %v241
        %344 = vmatpush1.msra.mxu0 %v240
        %345 = vmatprep.subr.mxu0 %v188
        %346 = vmatpush1.msra.mxu0 %v187
        %347 = vmatprep.subr.mxu0 %v265
        %348 = vmatpush1.msra.mxu0 %v264
        %349 = vmatprep.subr.mxu0 %v307
        %350 = vmatpush1.msra.mxu0 %v303
        %351 = vmatprep.subr.mxu0 %v316
        %352 = vmatpush1.msra.mxu0 %v312
        %353 = vmatprep.subr.mxu0 %v325
        %354 = vmatpush1.msra.mxu0 %v321
        %355 = vmatprep.subr.mxu0 0.0
        %356 = vmatpush1.msra.mxu0 0.0
        %357 = vmatprep.subr.mxu0 0.0
        %358 = vmatpush1.msra.mxu0 0.0
        %359 = vmatprep.subr.mxu0 0.0
        %360 = vmatpush1.msra.mxu0 0.0
        %361 = vmatprep.subr.mxu0 0.0
        %362 = vmatpush1.msra.mxu0 0.0
        %363 = vmatprep.subr.mxu0 0.0
        %364 = vmatpush1.msra.mxu0 0.0
        %365 = vmatprep.subr.mxu0 0.0
        %366 = vmatpush1.msra.mxu0 0.0
        %367 = vmatprep.subr.mxu0 0.0
        %368 = vmatpush1.msra.mxu0 0.0
        %369 = vmatprep.subr.mxu0 0.0
        %370 = vmatpush1.msra.mxu0 0.0
        %371 = vmatprep.subr.mxu0 0.0
        %372 = vmatpush1.msra.mxu0 0.0
        %373 = vmatprep.subr.mxu0 0.0
        %374 = vmatpush1.msra.mxu0 0.0
        %375 = vmatprep.subr.mxu0 0.0
        %376 = vmatpush1.msra.mxu0 0.0
        %377 = vmatprep.subr.mxu0 0.0
        %378 = vmatpush1.msra.mxu0 0.0
        %379 = vmatprep.subr.mxu0 0.0
        %380 = vmatpush1.msra.mxu0 0.0
        %381 = vmatprep.subr.mxu0 0.0
        %382 = vmatpush1.msra.mxu0 0.0
        %383 = vmatprep.subr.mxu0 0.0
        %384 = vmatpush1.msra.mxu0 0.0
        %385 = vmatprep.subr.mxu0 0.0
        %386 = vmatpush1.msra.mxu0 0.0
        %387 = vmatprep.subr.mxu0 0.0
        %388 = vmatpush1.msra.mxu0 0.0
        %389 = vmatprep.subr.mxu0 0.0
        %390 = vmatpush1.msra.mxu0 0.0
        %391 = vmatprep.subr.mxu0 0.0
        %392 = vmatpush1.msra.mxu0 0.0
        %393 = vmatprep.subr.mxu0 0.0
        %394 = vmatpush1.msra.mxu0 0.0
        %395 = vmatprep.subr.mxu0 0.0
        %396 = vmatpush1.msra.mxu0 0.0
        %397 = vmatprep.subr.mxu0 0.0
        %398 = vmatpush1.msra.mxu0 0.0
        %399 = vmatprep.subr.mxu0 0.0
        %400 = vmatpush1.msra.mxu0 0.0
        %401 = vmatprep.mubr.f32.mxu0 0.0
        %402 = vmatmul.mubr.f32.gmra.mrb[0].mxu0 %v335
        %v403 = vpop.f32.mrb[0].mxu0
        %v404 = vadd.f32 %v331, %v403
        %v405 = vpop.f32.mrb[0].mxu0
        %v406 = vadd.f32 %v331, %v405
        %407 = vdwg.mxu0
        %408 = vst [vmem:[%s186] sm:$0xff] %v404
        %409 = vst [vmem:[%s186 + $0x8] sm:$0xff] %v406
        %s410 = sand.u32 %s96, 1
        %s411 = scalar_lea.sflag [#allocation4], %s410
        %s412 = sand.u32 %s96, 1
        %s413 = smul.addr %s412, 16
        %s414 = scalar_lea.vmem [#allocation5], %s413
        // Predicated region
        $region37: #{tpu_custom_call.1} parent=31 // pred_check
          %p415 = pneg %p106
        $region38: #{tpu_custom_call.1} parent=31 // pred_check_branch
          %417 = sbr.rel (%p415) target = $region40
        $region39: #{tpu_custom_call.1} parent=31 // pred_region
          %s419 = ssub.s32 256, 256
          %420 = vsyncadd %s411, %s419
          %s421 = smul.addr %s20, 2
          %s422 = smul.addr %s421, 128
          %s423 = scalar_lea.hbm %s3, %s422
          %s425 = sshll.u32 %s414, 4
          %s426 = int_to_ptr.vmem [resolvable:$true] %s425
          %428 = dma.vmem_to_hbm [thread:$0]  %s426, 256, %s423, %s411
        $region40: #{tpu_custom_call.1} parent=31 // pred_fallthru
          _
      $region32: #{tpu_custom_call.1} parent=5 // pred_fallthru
        _
      %p429 = scmp.le.s32.totalorder 2, %s15
      // Predicated region
      $region41: #{tpu_custom_call.1} parent=5 // pred_check
        %p430 = pneg %p429
      $region42: #{tpu_custom_call.1} parent=5 // pred_check_branch
        %432 = sbr.rel (%p430) target = $region44
      $region43: #{tpu_custom_call.1} parent=5 // pred_region
        %s433 = ssub.s32 %s15, 2
        // Predicated region
        $region45: #{tpu_custom_call.1} parent=43 // pred_check
          %p434 = pneg %p112
        $region46: #{tpu_custom_call.1} parent=43 // pred_check_branch
          %436 = sbr.rel (%p434) target = $region48
        $region47: #{tpu_custom_call.1} parent=43 // pred_region
          %s437 = sand.u32 %s97, 1
          %s438 = scalar_lea.sflag [#allocation4], %s437
          %s439 = sand.u32 %s97, 1
          %s440 = smul.addr %s439, 16
          %s441 = scalar_lea.vmem [#allocation5], %s440
          %442 = dma.done %s438, 256
        $region48: #{tpu_custom_call.1} parent=43 // pred_fallthru
          _
      $region44: #{tpu_custom_call.1} parent=5 // pred_fallthru
        _
    $region6: #{tpu_custom_call.1} parent=1 // loop_footer
      %s19 = sadd.s32 1, %s15
    $region7: #{tpu_custom_call.1} parent=1 // loop_footer_branch
      %14 = sbr.rel target = $region3
    $region8: #{tpu_custom_call.1} parent=1 // loop_exit
      _
    %443 = vsyncpa [#allocation3], 1
    %s444 = scalar_lea.sflag [#allocation3], 1
    %445 = vsyncpa %s444, 1
    %446 = vsyncpa [#allocation4], 1
    %s447 = scalar_lea.sflag [#allocation4], 1
    %448 = vsyncpa %s447, 1

</llo_original>
